<compile_context>
chip_gen: v6e
topology: v6e:2x2x1
jax: 0.10.0
libtpu: 0.0.40
codegen_flags: <defaults>
</compile_context>

<pallas_src>
import functools

import jax
import jax.numpy as jnp
from jax.experimental import pallas as pl
from jax.experimental.pallas import tpu as pltpu

SIGMA_MAX = 2.0
SIGMA_MIN = -20.0


def _actor_prob_kernel(s_ref, w1_ref, b1_ref, wh_ref, bh_ref, out_ref, *,
                       max_action, unbounded, act_dim):
    """h = ReLU(s@W1+b1); z = h@[Wmu||Wsg]+[bmu||bsg];
    lanes [0,act_dim) -> mu (= max_action*tanh(z) unless unbounded),
    lanes [act_dim,2*act_dim) -> sigma (= exp(clip(z)))."""
    # preprocess_net: single hidden linear + ReLU (MXU matmul, f32 accumulation)
    h = jnp.dot(s_ref[...], w1_ref[...], preferred_element_type=jnp.float32)
    h = jnp.maximum(h + b1_ref[...], 0.0)            # [TB, H] + [1, H] broadcast (VPU)

    # second-stage matmul in the weights' dtype (no-op for f32, keeps bf16 path bf16)
    h_c = h.astype(wh_ref.dtype)

    # fused mu||sigma head: one MXU matmul, one lane-dense output tile
    z = jnp.dot(h_c, wh_ref[...], preferred_element_type=jnp.float32) + bh_ref[...]

    mu = z
    if not unbounded:
        mu = max_action * jnp.tanh(z)                 # tanh -> EUP slot (free under MXU)
    sigma = jnp.exp(jnp.clip(z, SIGMA_MIN, SIGMA_MAX))

    # per-lane select: mu in the first act_dim lanes, sigma in the next act_dim lanes;
    # remaining lanes are padding and get sliced off in the wrapper.
    lane = jax.lax.broadcasted_iota(jnp.int32, z.shape, 1)
    out_ref[...] = jnp.where(lane < act_dim, mu, sigma)
    # TODO(synk): non-conditioned sigma (nn.Parameter broadcast) path not implemented in-kernel.


def _round_up(n, m):
    return ((n + m - 1) // m) * m


def _cdiv(a, b):
    return -(-a // b)


def actor_prob_forward(s, w1, b1, w_mu, b_mu, w_sigma, b_sigma, *,
                       max_action=1.0, unbounded=False, state=None,
                       batch_tile=1024, compute_dtype=jnp.bfloat16):
    """Pallas wrapper mirroring ActorProb.forward: returns ((mu, sigma), state)."""
    B, obs_dim = s.shape
    hidden = w1.shape[1]
    act_dim = w_mu.shape[1]

    # Packed mu||sigma output: one lane-dense slab of width head_p (>= 2*act_dim).
    head_p = _round_up(2 * act_dim, 128)

    # ---- batch tiling -------------------------------------------------------
    batch_tile = _round_up(max(int(batch_tile), 8), 8)       # keep 8-aligned
    b8 = _round_up(B, 8)
    steps = _cdiv(b8, batch_tile)
    # ensure >=2 grid steps for decent-sized batches so v7x's 2 TCs both get work
    if steps == 1 and b8 >= 256:
        steps = 2
    tb = _round_up(_cdiv(b8, steps), 8)                       # tile re-derived from steps:
    b_p = steps * tb                                          # batch waste is O(8*steps) rows

    # ---- operand prep (no obs/hidden padding; heads fused & padded once) ----
    s_p = s if s.dtype == compute_dtype else s.astype(compute_dtype)
    if b_p != B:
        s_p = jnp.pad(s_p, ((0, b_p - B), (0, 0)))            # zero rows; outputs sliced off

    w1_c = w1.astype(compute_dtype)
    b1_c = jnp.reshape(b1, (1, hidden)).astype(jnp.float32)   # biases stay f32 (epilogue)

    w_head = jnp.concatenate([w_mu, w_sigma], axis=1)         # [hidden, 2*act_dim]
    w_head = jnp.pad(w_head, ((0, 0), (0, head_p - 2 * act_dim))).astype(compute_dtype)
    b_head = jnp.concatenate([jnp.reshape(b_mu, (1, act_dim)),
                              jnp.reshape(b_sigma, (1, act_dim))], axis=1)
    b_head = jnp.pad(b_head, ((0, 0), (0, head_p - 2 * act_dim))).astype(jnp.float32)

    # ---- VMEM budget (double-buffered tiles + resident weights + temporaries) ----
    cbytes = jnp.dtype(compute_dtype).itemsize
    vmem_bytes = (
        2 * tb * obs_dim * cbytes            # double-buffered s tile
        + 2 * tb * head_p * 4                # double-buffered output tile
        + obs_dim * hidden * cbytes + hidden * 4      # W1 + b1 (resident)
        + hidden * head_p * cbytes + head_p * 4       # W_head + b_head (resident)
        + tb * hidden * (4 + cbytes)         # h (f32) + bf16 cast copy
        + tb * head_p * 4 * 3                # z / mu / sigma temporaries
    )
    vmem_limit = int(max(16 << 20, min(2 * vmem_bytes + (4 << 20), 64 << 20)))

    kernel = functools.partial(_actor_prob_kernel,
                               max_action=float(max_action),
                               unbounded=bool(unbounded),
                               act_dim=int(act_dim))

    out_p = pl.pallas_call(
        kernel,
        out_shape=jax.ShapeDtypeStruct((b_p, head_p), jnp.float32),
        grid=(steps,),
        in_specs=[
            pl.BlockSpec((tb, obs_dim), lambda i: (i, 0)),        # s: tiled over batch
            pl.BlockSpec((obs_dim, hidden), lambda i: (0, 0)),    # W1: VMEM-resident
            pl.BlockSpec((1, hidden), lambda i: (0, 0)),          # b1
            pl.BlockSpec((hidden, head_p), lambda i: (0, 0)),     # W_mu||W_sigma
            pl.BlockSpec((1, head_p), lambda i: (0, 0)),          # b_mu||b_sigma
        ],
        out_specs=pl.BlockSpec((tb, head_p), lambda i: (i, 0)),   # packed mu||sigma
        compiler_params=pltpu.CompilerParams(
            dimension_semantics=("parallel",),   # independent batch steps -> v7x 2-TC sharding
            vmem_limit_bytes=vmem_limit,
        ),
    )(s_p, w1_c, b1_c, w_head, b_head)

    mu = out_p[:B, :act_dim]
    sigma = out_p[:B, act_dim:2 * act_dim]
    # `state` / `info` are pass-through control metadata in tianshou; no compute.
    return (mu, sigma), state


def _init_linear(key, fan_in, fan_out):
    """PyTorch nn.Linear default init: U(-1/sqrt(fan_in), 1/sqrt(fan_in))."""
    kw, kb = jax.random.split(key)
    bound = 1.0 / jnp.sqrt(jnp.float32(fan_in))
    w = jax.random.uniform(kw, (fan_in, fan_out), jnp.float32, -bound, bound)
    b = jax.random.uniform(kb, (1, fan_out), jnp.float32, -bound, bound)
    return w, b


def _reference(s, w1, b1, w_mu, b_mu, w_sigma, b_sigma, max_action, unbounded):
    hp = jax.lax.Precision.HIGHEST
    h = jnp.maximum(jnp.dot(s, w1, precision=hp) + b1, 0.0)
    mu = jnp.dot(h, w_mu, precision=hp) + b_mu
    if not unbounded:
        mu = max_action * jnp.tanh(mu)
    sg = jnp.dot(h, w_sigma, precision=hp) + b_sigma
    sigma = jnp.exp(jnp.clip(sg, SIGMA_MIN, SIGMA_MAX))
    return mu, sigma


if __name__ == "__main__":
    # Small, module-consistent shapes.
    B = 8            # batch
    OBS = 16         # flattened observation dim (input to preprocess_net)
    HIDDEN = 32      # preprocess_net.output_dim
    ACTION_SHAPE = (4,)
    MAX_ACTION = 1.0
    UNBOUNDED = False

    act_dim = 1
    for d in ACTION_SHAPE:
        act_dim *= d

    key = jax.random.PRNGKey(0)
    k_s, k_l1, k_mu, k_sg = jax.random.split(key, 4)

    s = jax.random.normal(k_s, (B, OBS), jnp.float32)
    w1, b1 = _init_linear(k_l1, OBS, HIDDEN)          # preprocess_net linear
    w_mu, b_mu = _init_linear(k_mu, HIDDEN, act_dim)  # ActorProb.mu linear
    w_sg, b_sg = _init_linear(k_sg, HIDDEN, act_dim)  # ActorProb.sigma linear

    mu_ref, sigma_ref = _reference(s, w1, b1, w_mu, b_mu, w_sg, b_sg,
                                   MAX_ACTION, UNBOUNDED)

    # f32 operand path: tight check against the high-precision reference.
    (mu, sigma), state = actor_prob_forward(
        s, w1, b1, w_mu, b_mu, w_sg, b_sg,
        max_action=MAX_ACTION, unbounded=UNBOUNDED,
        compute_dtype=jnp.float32)
    mu = jax.block_until_ready(mu)
    sigma = jax.block_until_ready(sigma)

    assert mu.shape == (B, act_dim) and sigma.shape == (B, act_dim)
    assert state is None
    assert jnp.allclose(mu, mu_ref, atol=1e-5, rtol=1e-5)
    assert jnp.allclose(sigma, sigma_ref, atol=1e-5, rtol=1e-5)

    # default bf16 operand path (MXU fast path): looser tolerance.
    (mu_bf, sigma_bf), _ = actor_prob_forward(
        s, w1, b1, w_mu, b_mu, w_sg, b_sg,
        max_action=MAX_ACTION, unbounded=UNBOUNDED)
    mu_bf = jax.block_until_ready(mu_bf)
    sigma_bf = jax.block_until_ready(sigma_bf)

    assert mu_bf.shape == (B, act_dim) and sigma_bf.shape == (B, act_dim)
    assert jnp.allclose(mu_bf, mu_ref, atol=5e-2, rtol=5e-2)
    assert jnp.allclose(sigma_bf, sigma_ref, atol=5e-2, rtol=5e-2)

    print("KERNEL_OK")
</pallas_src>

<mosaic_0001>
module attributes {stable_mosaic.version = 11 : i64} {
  func.func @_actor_prob_kernel(%arg0: i32, %arg1: memref<8x16xf32, #tpu.memory_space<vmem>>, %arg2: memref<16x32xf32, #tpu.memory_space<vmem>>, %arg3: memref<1x32xf32, #tpu.memory_space<vmem>>, %arg4: memref<32x128xf32, #tpu.memory_space<vmem>>, %arg5: memref<1x128xf32, #tpu.memory_space<vmem>>, %arg6: memref<8x128xf32, #tpu.memory_space<vmem>>) attributes {dimension_semantics = [#tpu.dimension_semantics<parallel>], iteration_bounds = array<i64: 1>, scalar_prefetch = 0 : i64, scratch_operands = 0 : i64, tpu.core_type = #tpu.core_type<tc>, window_params = [{transform_indices = @transform_0, window_bounds = array<i64: 8, 16>}, {pipeline_mode = #tpu.pipeline_mode<synchronous>, transform_indices = @transform_1, window_bounds = array<i64: 16, 32>}, {pipeline_mode = #tpu.pipeline_mode<synchronous>, transform_indices = @transform_2, window_bounds = array<i64: 1, 32>}, {pipeline_mode = #tpu.pipeline_mode<synchronous>, transform_indices = @transform_3, window_bounds = array<i64: 32, 128>}, {pipeline_mode = #tpu.pipeline_mode<synchronous>, transform_indices = @transform_4, window_bounds = array<i64: 1, 128>}, {transform_indices = @transform_5, window_bounds = array<i64: 8, 128>}]} {
    %c0 = arith.constant 0 : index
    %c0_0 = arith.constant 0 : index
    %0 = vector.load %arg1[%c0, %c0_0] : memref<8x16xf32, #tpu.memory_space<vmem>>, vector<8x16xf32>
    %c0_1 = arith.constant 0 : index
    %c0_2 = arith.constant 0 : index
    %1 = vector.load %arg2[%c0_1, %c0_2] : memref<16x32xf32, #tpu.memory_space<vmem>>, vector<16x32xf32>
    %cst = arith.constant dense<0.000000e+00> : vector<8x32xf32>
    %2 = tpu.matmul %0, %1, %cst {dimension_numbers = #tpu.dot_dimension_numbers<[1], [0], [0], [1], [0, 0, 1, 1], [], []>} : vector<8x16xf32>, vector<16x32xf32>, vector<8x32xf32> -> vector<8x32xf32>
    %c0_3 = arith.constant 0 : index
    %c0_4 = arith.constant 0 : index
    %3 = vector.load %arg3[%c0_3, %c0_4] : memref<1x32xf32, #tpu.memory_space<vmem>>, vector<1x32xf32>
    %4 = vector.broadcast %3 : vector<1x32xf32> to vector<8x32xf32>
    %5 = arith.addf %2, %4 : vector<8x32xf32>
    %cst_5 = arith.constant 0.000000e+00 : f32
    %6 = vector.broadcast %cst_5 : f32 to vector<8x32xf32>
    %7 = arith.maximumf %5, %6 : vector<8x32xf32>
    %c0_6 = arith.constant 0 : index
    %c0_7 = arith.constant 0 : index
    %8 = vector.load %arg4[%c0_6, %c0_7] : memref<32x128xf32, #tpu.memory_space<vmem>>, vector<32x128xf32>
    %cst_8 = arith.constant dense<0.000000e+00> : vector<8x128xf32>
    %9 = tpu.matmul %7, %8, %cst_8 {dimension_numbers = #tpu.dot_dimension_numbers<[1], [0], [0], [1], [0, 0, 1, 1], [], []>} : vector<8x32xf32>, vector<32x128xf32>, vector<8x128xf32> -> vector<8x128xf32>
    %c0_9 = arith.constant 0 : index
    %c0_10 = arith.constant 0 : index
    %10 = vector.load %arg5[%c0_9, %c0_10] : memref<1x128xf32, #tpu.memory_space<vmem>>, vector<1x128xf32>
    %11 = vector.broadcast %10 : vector<1x128xf32> to vector<8x128xf32>
    %12 = arith.addf %9, %11 : vector<8x128xf32>
    %13 = math.tanh %12 : vector<8x128xf32>
    %cst_11 = arith.constant 1.000000e+00 : f32
    %14 = vector.broadcast %cst_11 : f32 to vector<8x128xf32>
    %15 = arith.mulf %14, %13 : vector<8x128xf32>
    %cst_12 = arith.constant -2.000000e+01 : f32
    %cst_13 = arith.constant 2.000000e+00 : f32
    %16 = vector.broadcast %cst_12 : f32 to vector<8x128xf32>
    %17 = arith.maximumf %16, %12 : vector<8x128xf32>
    %18 = vector.broadcast %cst_13 : f32 to vector<8x128xf32>
    %19 = arith.minimumf %18, %17 : vector<8x128xf32>
    %20 = math.exp %19 : vector<8x128xf32>
    %21 = tpu.iota {dimensions = array<i32: 1>} : vector<8x128xi32>
    %c4_i32 = arith.constant 4 : i32
    %22 = vector.broadcast %c4_i32 : i32 to vector<8x128xi32>
    %23 = arith.cmpi slt, %21, %22 : vector<8x128xi32>
    %24 = arith.select %23, %15, %20 : vector<8x128xi1>, vector<8x128xf32>
    %c0_14 = arith.constant 0 : index
    %c0_15 = arith.constant 0 : index
    %25 = vector.load %arg6[%c0_14, %c0_15] : memref<8x128xf32, #tpu.memory_space<vmem>>, vector<8x128xf32>
    tpu.vector_store %arg6[%c0_14, %c0_15], %24 {strides = array<i32>} : memref<8x128xf32, #tpu.memory_space<vmem>>, vector<8x128xf32>,
    return
  }
  func.func @transform_0(%arg0: i32) -> (i32, i32) {
    %c0_i32 = arith.constant 0 : i32
    %c0_i32_0 = arith.constant 0 : i32
    return %arg0, %c0_i32 : i32, i32
  }
  func.func @transform_1(%arg0: i32) -> (i32, i32) {
    %c0_i32 = arith.constant 0 : i32
    %c0_i32_0 = arith.constant 0 : i32
    %c0_i32_1 = arith.constant 0 : i32
    return %c0_i32, %c0_i32_0 : i32, i32
  }
  func.func @transform_2(%arg0: i32) -> (i32, i32) {
    %c0_i32 = arith.constant 0 : i32
    %c0_i32_0 = arith.constant 0 : i32
    %c0_i32_1 = arith.constant 0 : i32
    return %c0_i32, %c0_i32_0 : i32, i32
  }
  func.func @transform_3(%arg0: i32) -> (i32, i32) {
    %c0_i32 = arith.constant 0 : i32
    %c0_i32_0 = arith.constant 0 : i32
    %c0_i32_1 = arith.constant 0 : i32
    return %c0_i32, %c0_i32_0 : i32, i32
  }
  func.func @transform_4(%arg0: i32) -> (i32, i32) {
    %c0_i32 = arith.constant 0 : i32
    %c0_i32_0 = arith.constant 0 : i32
    %c0_i32_1 = arith.constant 0 : i32
    return %c0_i32, %c0_i32_0 : i32, i32
  }
  func.func @transform_5(%arg0: i32) -> (i32, i32) {
    %c0_i32 = arith.constant 0 : i32
    %c0_i32_0 = arith.constant 0 : i32
    return %arg0, %c0_i32 : i32, i32
  }
}

</mosaic_0001>

<llo_original>
// kernel: tpu_custom_call.1
$region0: #{tpu_custom_call.1}
  #allocation0 [shape = 'u32[]', space=smem, size = 0x4, offset = 0x4, fixed_abs, tag = 'smem constant byte address 0x4 - core index']
  #allocation1 [shape = 'u32[144,128]{1,0:T(1,128)}', space=vmem, size = 0x12000, scoped, tag = 'internal scratch']
  %s0 = inlined_call_operand.hbm [shape: f32[8,16], index: 0, kind: input, shape index: {}]
  %s1 = inlined_call_operand.hbm [shape: f32[16,32], index: 1, kind: input, shape index: {}]
  %s2 = inlined_call_operand.vmem [shape: f32[1,32], index: 2, kind: input, shape index: {}]
  %s3 = inlined_call_operand.hbm [shape: f32[32,128], index: 3, kind: input, shape index: {}]
  %s4 = inlined_call_operand.vmem [shape: f32[1,128], index: 4, kind: input, shape index: {}]
  %s5 = inlined_call_operand.hbm [shape: f32[8,128], index: 5, kind: output, shape index: {}]
  %s6 = sld [smem:[#allocation0]]
  $region42: #{tpu_custom_call.1} parent=0
    _
  %s8 = ssub.s32 1, %s6
  %s9 = scalar_select 0, %s8, %s6
  $region1: #{tpu_custom_call.1} parent=0
    #allocation2 [shape = 'u8[4096]{0}', space=vmem, size = 0x1000, scoped, tag = 'input window, operand 0, single buffered']
    #allocation3 [shape = 's32[1]{0}', space=sflag, size = 0x4, scoped, tag = 'scoped memory for tpu_custom_call.1']
    #allocation4 [shape = 's32[1]{0}', space=sflag, size = 0x4, scoped, tag = 'scoped memory for tpu_custom_call.1']
    #allocation5 [shape = 'u8[8192]{0}', space=vmem, size = 0x2000, scoped, tag = 'input window, operand 1, single buffered']
    #allocation6 [shape = 's32[1]{0}', space=sflag, size = 0x4, scoped, tag = 'scoped memory for tpu_custom_call.1']
    #allocation7 [shape = 'u8[16384]{0}', space=vmem, size = 0x4000, scoped, tag = 'input window, operand 3, single buffered']
    #allocation8 [shape = 'u8[4096]{0}', space=vmem, size = 0x1000, scoped, tag = 'output window, operand 0, single buffered']
    %10 = vsyncpa [#allocation3], 0
    %11 = vsyncpa [#allocation6], 0
    %12 = vsyncpa [#allocation4], 0
    // Predicated region
    $region2: #{tpu_custom_call.1} parent=1 // pred_check
      _
    $region3: #{tpu_custom_call.1} parent=1 // pred_check_branch
      %14 = sbr.rel (0) target = $region5
    $region4: #{tpu_custom_call.1} parent=1 // pred_region
      %s16 = ssub.s32 128, 128
      %17 = vsyncadd [#allocation3], %s16
      %s19 = sshll.u32 [#allocation2], 4
      %s20 = int_to_ptr.vmem [resolvable:$true] %s19
      %22 = dma.hbm_to_vmem [thread:$0]  %s0, 128, %s20, [#allocation3]
    $region5: #{tpu_custom_call.1} parent=1 // pred_fallthru
      _
    // Predicated region
    $region6: #{tpu_custom_call.1} parent=1 // pred_check
      _
    $region7: #{tpu_custom_call.1} parent=1 // pred_check_branch
      %24 = sbr.rel (0) target = $region9
    $region8: #{tpu_custom_call.1} parent=1 // pred_region
      %s26 = ssub.s32 256, 256
      %27 = vsyncadd [#allocation6], %s26
      %s28 = sshll.u32 [#allocation5], 4
      %s29 = int_to_ptr.vmem [resolvable:$true] %s28
      %34 = dma.hbm_to_vmem [thread:$0]  %s1, 256, %s29, [#allocation6], 128, 128, 8
    $region9: #{tpu_custom_call.1} parent=1 // pred_fallthru
      _
    // Predicated region
    $region10: #{tpu_custom_call.1} parent=1 // pred_check
      _
    $region11: #{tpu_custom_call.1} parent=1 // pred_check_branch
      %36 = sbr.rel (0) target = $region13
    $region12: #{tpu_custom_call.1} parent=1 // pred_region
      _
    $region13: #{tpu_custom_call.1} parent=1 // pred_fallthru
      _
    // Predicated region
    $region14: #{tpu_custom_call.1} parent=1 // pred_check
      _
    $region15: #{tpu_custom_call.1} parent=1 // pred_check_branch
      %38 = sbr.rel (0) target = $region17
    $region16: #{tpu_custom_call.1} parent=1 // pred_region
      %s40 = ssub.s32 512, 512
      %41 = vsyncadd [#allocation6], %s40
      %s42 = sshll.u32 [#allocation7], 4
      %s43 = int_to_ptr.vmem [resolvable:$true] %s42
      %48 = dma.hbm_to_vmem [thread:$0]  %s3, 512, %s43, [#allocation6], 128, 128, 8
    $region17: #{tpu_custom_call.1} parent=1 // pred_fallthru
      _
    // Predicated region
    $region18: #{tpu_custom_call.1} parent=1 // pred_check
      _
    $region19: #{tpu_custom_call.1} parent=1 // pred_check_branch
      %50 = sbr.rel (0) target = $region21
    $region20: #{tpu_custom_call.1} parent=1 // pred_region
      _
    $region21: #{tpu_custom_call.1} parent=1 // pred_fallthru
      _
    // Predicated region
    $region22: #{tpu_custom_call.1} parent=1 // pred_check
      _
    $region23: #{tpu_custom_call.1} parent=1 // pred_check_branch
      %52 = sbr.rel (0) target = $region25
    $region24: #{tpu_custom_call.1} parent=1 // pred_region
      %53 = dma.done [#allocation3], 128
    $region25: #{tpu_custom_call.1} parent=1 // pred_fallthru
      _
    // Predicated region
    $region26: #{tpu_custom_call.1} parent=1 // pred_check
      _
    $region27: #{tpu_custom_call.1} parent=1 // pred_check_branch
      %55 = sbr.rel (0) target = $region29
    $region28: #{tpu_custom_call.1} parent=1 // pred_region
      %56 = dma.done [#allocation6], 256
    $region29: #{tpu_custom_call.1} parent=1 // pred_fallthru
      _
    // Predicated region
    $region30: #{tpu_custom_call.1} parent=1 // pred_check
      _
    $region31: #{tpu_custom_call.1} parent=1 // pred_check_branch
      %58 = sbr.rel (0) target = $region33
    $region32: #{tpu_custom_call.1} parent=1 // pred_region
      %59 = dma.done [#allocation6], 512
    $region33: #{tpu_custom_call.1} parent=1 // pred_fallthru
      _
    %v60 = vld [vmem:[#allocation2] sm:$0xff]
    %v61 = vld [vmem:[#allocation5] sm:$0xff]
    %v62 = vld [vmem:[#allocation5 + $0x8] sm:$0xff]
    %v63 = vld [vmem:[%s2] sm:$0x1]
    %v65 = vlaneseq
    %v66 = vshrl.u32 %v65, 7
    %v67 = vsub.s32 0, %v66
    %v68 = vrot.slane %v63, %v67
    %vm70 = vcmask 130048
    %v72 = vsel %vm70, %v60, 0
    %74 = vmatprep.subr.mxu0 0.0
    %75 = vmatpush1.msra.mxu0 0.0
    %76 = vmatprep.subr.mxu0 0.0
    %77 = vmatpush1.msra.mxu0 0.0
    %78 = vmatprep.subr.mxu0 0.0
    %79 = vmatpush1.msra.mxu0 0.0
    %80 = vmatprep.subr.mxu0 0.0
    %81 = vmatpush1.msra.mxu0 0.0
    %82 = vmatprep.subr.mxu0 0.0
    %83 = vmatpush1.msra.mxu0 0.0
    %84 = vmatprep.subr.mxu0 0.0
    %85 = vmatpush1.msra.mxu0 0.0
    %86 = vmatprep.subr.mxu0 0.0
    %87 = vmatpush1.msra.mxu0 0.0
    %88 = vmatprep.subr.mxu0 0.0
    %89 = vmatpush1.msra.mxu0 0.0
    %90 = vmatprep.subr.mxu0 0.0
    %91 = vmatpush1.msra.mxu0 0.0
    %92 = vmatprep.subr.mxu0 0.0
    %93 = vmatpush1.msra.mxu0 0.0
    %94 = vmatprep.subr.mxu0 0.0
    %95 = vmatpush1.msra.mxu0 0.0
    %96 = vmatprep.subr.mxu0 0.0
    %97 = vmatpush1.msra.mxu0 0.0
    %98 = vmatprep.subr.mxu0 0.0
    %99 = vmatpush1.msra.mxu0 0.0
    %100 = vmatprep.subr.mxu0 0.0
    %101 = vmatpush1.msra.mxu0 0.0
    %102 = vmatprep.subr.mxu0 0.0
    %103 = vmatpush1.msra.mxu0 %v62
    %104 = vmatprep.subr.mxu0 0.0
    %105 = vmatpush1.msra.mxu0 %v61
    %106 = vmatprep.subr.mxu0 0.0
    %107 = vmatpush2.msra.mxu0 0.0
    %108 = vmatprep.subr.mxu0 0.0
    %109 = vmatpush2.msra.mxu0 0.0
    %110 = vmatprep.subr.mxu0 0.0
    %111 = vmatpush2.msra.mxu0 0.0
    %112 = vmatprep.subr.mxu0 0.0
    %113 = vmatpush2.msra.mxu0 0.0
    %114 = vmatprep.subr.mxu0 0.0
    %115 = vmatpush2.msra.mxu0 0.0
    %116 = vmatprep.subr.mxu0 0.0
    %117 = vmatpush2.msra.mxu0 0.0
    %118 = vmatprep.subr.mxu0 0.0
    %119 = vmatpush2.msra.mxu0 0.0
    %120 = vmatprep.subr.mxu0 0.0
    %121 = vmatpush2.msra.mxu0 0.0
    %122 = vmatprep.subr.mxu0 0.0
    %123 = vmatpush2.msra.mxu0 0.0
    %124 = vmatprep.subr.mxu0 0.0
    %125 = vmatpush2.msra.mxu0 0.0
    %126 = vmatprep.subr.mxu0 0.0
    %127 = vmatpush2.msra.mxu0 0.0
    %128 = vmatprep.subr.mxu0 0.0
    %129 = vmatpush2.msra.mxu0 0.0
    %130 = vmatprep.subr.mxu0 0.0
    %131 = vmatpush2.msra.mxu0 0.0
    %132 = vmatprep.subr.mxu0 0.0
    %133 = vmatpush2.msra.mxu0 0.0
    %134 = vmatprep.subr.mxu0 0.0
    %135 = vmatpush2.msra.mxu0 0.0
    %136 = vmatprep.subr.mxu0 0.0
    %137 = vmatpush2.msra.mxu0 0.0
    %138 = vmatprep.mubr.f32.mxu0 0.0
    %139 = vmatmul.mubr.f32.gmra.mxu0 %v72
    %v140 = vpop.f32.mrf.mxu0
    %v141 = vadd.f32 %v68, %v140
    %v142 = vpop.f32.mrf.mxu0
    %143 = vdwg.mxu0
    %v144 = vmax.f32 %v141, 0.0
    %v145 = vld [vmem:[#allocation7] sm:$0xff]
    %v146 = vld [vmem:[#allocation7 + $0x8] sm:$0xff]
    %v147 = vld [vmem:[#allocation7 + $0x10] sm:$0xff]
    %v148 = vld [vmem:[#allocation7 + $0x18] sm:$0xff]
    %v149 = vld [vmem:[%s4] sm:$0x1]
    %v151 = vlaneseq
    %v152 = vshrl.u32 %v151, 7
    %v153 = vsub.s32 0, %v152
    %v154 = vrot.slane %v149, %v153
    %vm156 = vcmask 261120
    %v158 = vsel %vm156, %v144, 0
    %160 = vmatprep.subr.mxu0 0.0
    %161 = vmatpush1.msra.mxu0 0.0
    %162 = vmatprep.subr.mxu0 0.0
    %163 = vmatpush1.msra.mxu0 0.0
    %164 = vmatprep.subr.mxu0 0.0
    %165 = vmatpush1.msra.mxu0 0.0
    %166 = vmatprep.subr.mxu0 0.0
    %167 = vmatpush1.msra.mxu0 0.0
    %168 = vmatprep.subr.mxu0 0.0
    %169 = vmatpush1.msra.mxu0 0.0
    %170 = vmatprep.subr.mxu0 0.0
    %171 = vmatpush1.msra.mxu0 0.0
    %172 = vmatprep.subr.mxu0 0.0
    %173 = vmatpush1.msra.mxu0 0.0
    %174 = vmatprep.subr.mxu0 0.0
    %175 = vmatpush1.msra.mxu0 0.0
    %176 = vmatprep.subr.mxu0 0.0
    %177 = vmatpush1.msra.mxu0 0.0
    %178 = vmatprep.subr.mxu0 0.0
    %179 = vmatpush1.msra.mxu0 0.0
    %180 = vmatprep.subr.mxu0 0.0
    %181 = vmatpush1.msra.mxu0 0.0
    %182 = vmatprep.subr.mxu0 0.0
    %183 = vmatpush1.msra.mxu0 0.0
    %184 = vmatprep.subr.mxu0 0.0
    %185 = vmatpush1.msra.mxu0 %v148
    %186 = vmatprep.subr.mxu0 0.0
    %187 = vmatpush1.msra.mxu0 %v147
    %188 = vmatprep.subr.mxu0 0.0
    %189 = vmatpush1.msra.mxu0 %v146
    %190 = vmatprep.subr.mxu0 0.0
    %191 = vmatpush1.msra.mxu0 %v145
    %192 = vmatprep.subr.mxu0 0.0
    %193 = vmatpush2.msra.mxu0 0.0
    %194 = vmatprep.subr.mxu0 0.0
    %195 = vmatpush2.msra.mxu0 0.0
    %196 = vmatprep.subr.mxu0 0.0
    %197 = vmatpush2.msra.mxu0 0.0
    %198 = vmatprep.subr.mxu0 0.0
    %199 = vmatpush2.msra.mxu0 0.0
    %200 = vmatprep.subr.mxu0 0.0
    %201 = vmatpush2.msra.mxu0 0.0
    %202 = vmatprep.subr.mxu0 0.0
    %203 = vmatpush2.msra.mxu0 0.0
    %204 = vmatprep.subr.mxu0 0.0
    %205 = vmatpush2.msra.mxu0 0.0
    %206 = vmatprep.subr.mxu0 0.0
    %207 = vmatpush2.msra.mxu0 0.0
    %208 = vmatprep.subr.mxu0 0.0
    %209 = vmatpush2.msra.mxu0 0.0
    %210 = vmatprep.subr.mxu0 0.0
    %211 = vmatpush2.msra.mxu0 0.0
    %212 = vmatprep.subr.mxu0 0.0
    %213 = vmatpush2.msra.mxu0 0.0
    %214 = vmatprep.subr.mxu0 0.0
    %215 = vmatpush2.msra.mxu0 0.0
    %216 = vmatprep.subr.mxu0 0.0
    %217 = vmatpush2.msra.mxu0 0.0
    %218 = vmatprep.subr.mxu0 0.0
    %219 = vmatpush2.msra.mxu0 0.0
    %220 = vmatprep.subr.mxu0 0.0
    %221 = vmatpush2.msra.mxu0 0.0
    %222 = vmatprep.subr.mxu0 0.0
    %223 = vmatpush2.msra.mxu0 0.0
    %224 = vmatprep.mubr.f32.mxu0 0.0
    %225 = vmatmul.mubr.f32.gmra.mxu0 %v158
    %v226 = vpop.f32.mrf.mxu0
    %v227 = vadd.f32 %v154, %v226
    %v228 = vpop.f32.mrf.mxu0
    %229 = vdwg.mxu0
    %v230 = vtanh.pop %v227
    %v231 = vmax.f32 %v227, -20.0
    %v232 = vmin.f32 %v231, 2.0
    %v233 = vmul.f32 %v232, 1.442695
    %v234 = vpow.pop %v233
    %v235 = vlaneseq
    %v236 = vand.u32 %v235, 127
    %vm237 = vcmp.lt.s32.totalorder %v236, 4
    %v238 = vsel %vm237, %v230, %v234
    %239 = vst [vmem:[#allocation8] sm:$0xff] %v238
    // Predicated region
    $region34: #{tpu_custom_call.1} parent=1 // pred_check
      _
    $region35: #{tpu_custom_call.1} parent=1 // pred_check_branch
      %241 = sbr.rel (0) target = $region37
    $region36: #{tpu_custom_call.1} parent=1 // pred_region
      %s243 = ssub.s32 128, 128
      %244 = vsyncadd [#allocation4], %s243
      %s246 = sshll.u32 [#allocation8], 4
      %s247 = int_to_ptr.vmem [resolvable:$true] %s246
      %249 = dma.vmem_to_hbm [thread:$0]  %s247, 128, %s5, [#allocation4]
    $region37: #{tpu_custom_call.1} parent=1 // pred_fallthru
      _
    // Predicated region
    $region38: #{tpu_custom_call.1} parent=1 // pred_check
      _
    $region39: #{tpu_custom_call.1} parent=1 // pred_check_branch
      %251 = sbr.rel (0) target = $region41
    $region40: #{tpu_custom_call.1} parent=1 // pred_region
      %252 = dma.done [#allocation4], 128
    $region41: #{tpu_custom_call.1} parent=1 // pred_fallthru
      _
    %253 = vsyncpa [#allocation3], 1
    %254 = vsyncpa [#allocation6], 1
    %255 = vsyncpa [#allocation4], 1

</llo_original>
